<compile_context>
chip_gen: v7x
topology: tpu7x:2x2x1
jax: 0.10.0
libtpu: 0.0.40
codegen_flags: <defaults>
</compile_context>

<pallas_src>
import math

import jax
import jax.numpy as jnp
from jax import lax
from jax.experimental import pallas as pl
from jax.experimental.pallas import tpu as pltpu

DEGREE = 10
RAD = DEGREE * (math.pi / 180.0)

# Cap on the (TB, S) f32 one-hot operand built inside the resident kernel.
_ONEHOT_LIMIT_BYTES = 2 * 1024 * 1024


def _round_up(x, m):
    return ((x + m - 1) // m) * m


def _vmem_budgets():
    """Generation-aware VMEM budgets.

    v5e/v6e have 128 MiB VMEM per TensorCore; v7x only 64 MiB (32 MiB scoped
    default).  Returns (vmem_limit_bytes, resident_table_limit_bytes).
    """
    phys = 64 * 1024 * 1024  # conservative default = v7x physical VMEM
    try:
        info = pltpu.get_tpu_info()
        cap = getattr(info, "vmem_capacity_bytes", None)
        if cap:
            phys = int(cap)
    except Exception:
        pass
    vmem_limit = min((phys * 3) // 4, 96 * 1024 * 1024)
    # Table is a single-buffered whole-array VMEM operand; leave room for the
    # one-hot operand, output blocks and compiler scratch.
    resident_limit = vmem_limit // 4
    return vmem_limit, resident_limit


def _pad_indices(indices, b_pad):
    b = indices.shape[0]
    if b_pad == b:
        return indices
    # Pad with row 0 (a valid index); padded rows are sliced off afterwards.
    return jnp.concatenate(
        [indices, jnp.zeros((b_pad - b,), dtype=indices.dtype)])


# ---------------------------------------------------------------------------
# Variant A: whole table VMEM-resident, one-hot MXU gather per batch tile.
# ---------------------------------------------------------------------------
def _resident_onehot_kernel(idx_ref, table_ref, out_ref):
    # idx_ref:   VMEM (TB, 1)  int32  -- this batch tile's row indices
    # table_ref: VMEM (S, E)   f32    -- whole table (single-buffered operand)
    # out_ref:   VMEM (TB, E)  f32
    s = table_ref.shape[0]
    tb = out_ref.shape[0]
    # One-hot gather on the MXU: onehot[b, j] = (j == idx[b]).  Both matmul
    # operands stay f32 so the row selection is (near-)exact.
    onehot = (lax.broadcasted_iota(jnp.int32, (tb, s), 1)
              == idx_ref[...]).astype(jnp.float32)
    rows = jnp.dot(onehot, table_ref[...],
                   preferred_element_type=jnp.float32,
                   precision=lax.Precision.HIGHEST)
    out_ref[...] = jnp.tanh(rows) * RAD


def _articulation_resident(table, idx_col, b_pad, tb, vmem_limit):
    s, e = table.shape
    return pl.pallas_call(
        _resident_onehot_kernel,
        out_shape=jax.ShapeDtypeStruct((b_pad, e), jnp.float32),
        grid_spec=pltpu.PrefetchScalarGridSpec(
            num_scalar_prefetch=0,
            grid=(b_pad // tb,),
            in_specs=[
                pl.BlockSpec((tb, 1), lambda i: (i, 0)),
                # Whole-array VMEM operand: DMA'd in once; its block never
                # changes across grid steps, so no per-step re-DMA and no
                # double-buffering of the table.
                pl.BlockSpec(memory_space=pltpu.MemorySpace.VMEM),
            ],
            out_specs=pl.BlockSpec((tb, e), lambda i: (i, 0)),
        ),
        compiler_params=pltpu.CompilerParams(
            dimension_semantics=("parallel",),  # independent batch tiles
            vmem_limit_bytes=vmem_limit,
        ),
    )(idx_col, table)


# ---------------------------------------------------------------------------
# Variant B: large-table fallback -- TB rows gathered per grid step via manual
# DMAs from the unpadded HBM table, cross-step double-buffered.
# ---------------------------------------------------------------------------
def _make_blocked_kernel(tb):
    def kernel(idx_ref, table_hbm, out_ref, gbuf, sem):
        # idx_ref:   SMEM (B_pad,)    int32 (scalar prefetch)
        # table_hbm: HBM  (S, E)      f32   (memory_space=pl.ANY)
        # out_ref:   VMEM (TB, E)     f32
        # gbuf:      VMEM (2, TB, E)  f32   double-buffered gather landing pad
        # sem:       DMA semaphores (2,)    one per buffer slot
        i = pl.program_id(0)
        n = pl.num_programs(0)
        slot = i % 2

        def issue(block, dst_slot):
            base = block * tb

            @pl.loop(0, tb)
            def _(r):
                row = idx_ref[base + r]
                pltpu.make_async_copy(
                    table_hbm.at[row], gbuf.at[dst_slot, r], sem.at[dst_slot]
                ).start()

        # Prime the pipeline: the very first block's row fetches.
        @pl.when(i == 0)
        def _():
            issue(0, 0)

        # Prefetch the NEXT block's rows into the other slot before waiting,
        # so their latency overlaps this block's wait + tanh + writeback.
        # (All SMEM index reads of this step happen here, before any .wait().)
        @pl.when(i + 1 < n)
        def _():
            issue(i + 1, 1 - slot)

        # Drain this block's row DMAs.  Per-copy waits on the shared per-slot
        # semaphore are correct whether the DMA semaphore counts bytes or
        # descriptors (total waited == total signaled for this slot).
        @pl.loop(0, tb)
        def _(r):
            pltpu.make_async_copy(
                table_hbm.at[0], gbuf.at[slot, r], sem.at[slot]
            ).wait()

        out_ref[...] = jnp.tanh(gbuf[slot]) * RAD

    return kernel


def _articulation_blocked(table, idx_padded, b_pad, tb, vmem_limit):
    s, e = table.shape
    return pl.pallas_call(
        _make_blocked_kernel(tb),
        out_shape=jax.ShapeDtypeStruct((b_pad, e), jnp.float32),
        grid_spec=pltpu.PrefetchScalarGridSpec(
            num_scalar_prefetch=1,
            grid=(b_pad // tb,),
            in_specs=[pl.BlockSpec(memory_space=pl.ANY)],
            out_specs=pl.BlockSpec((tb, e), lambda i, idx: (i, 0)),
            scratch_shapes=[
                pltpu.VMEM((2, tb, e), jnp.float32),
                pltpu.SemaphoreType.DMA((2,)),
            ],
        ),
        compiler_params=pltpu.CompilerParams(
            # "arbitrary": the cross-step double-buffer chain (slot priming at
            # i == 0, prefetch of block i+1 at step i) requires one sequential
            # stream over the grid axis.
            dimension_semantics=("arbitrary",),
            vmem_limit_bytes=vmem_limit,
        ),
    )(idx_padded, table)


def articulation_forward(embedding_table, indices, num_bones, *,
                         block_rows=128, force_blocked=False):
    """embedding_table: (size_dataset, num_bones*3) f32; indices: (B,) int32."""
    b = int(indices.shape[0])
    s, e = embedding_table.shape
    assert e == num_bones * 3
    table_bytes = s * e * 4

    vmem_limit, resident_limit = _vmem_budgets()
    # The resident path streams the whole table HBM->VMEM every call; only use
    # it when the table is tiny or not much larger than the rows we actually
    # gather (otherwise the blocked gather moves ~B*E*4 bytes instead).
    resident = (not force_blocked
                and table_bytes <= resident_limit
                and (table_bytes <= (1 << 20) or s <= 16 * b))

    if resident:
        b_pad8 = _round_up(b, 8)
        # Batch tile: big enough to amortize per-step overhead, small enough
        # that the (TB, S) one-hot operand stays tiny in VMEM.
        onehot_rows = max(8, ((_ONEHOT_LIMIT_BYTES // (4 * s)) // 8) * 8)
        tb = min(512, b_pad8, onehot_rows)
        b_pad = _round_up(b, tb)
        idx_col = _pad_indices(indices, b_pad).reshape(b_pad, 1)
        out = _articulation_resident(embedding_table, idx_col, b_pad, tb,
                                     vmem_limit)
    else:
        tb = _round_up(max(8, min(block_rows, b)), 8)
        b_pad = _round_up(b, tb)
        idx_padded = _pad_indices(indices, b_pad)
        out = _articulation_blocked(embedding_table, idx_padded, b_pad, tb,
                                    vmem_limit)

    return out[:b].reshape(b, num_bones, 3)


class ArticulationPredictorPallas:
    """JAX/Pallas port of the PyTorch ArticulationPredictor."""

    def __init__(self, size_dataset, num_bones, key):
        self.num_bones = num_bones
        self.size_dataset = size_dataset
        e = num_bones * 3
        # PyTorch nn.Embedding default init is N(0, 1).  Stored UNPADDED in
        # HBM; the kernels shape their own VMEM blocks/buffers.
        self.embedding = jax.random.normal(key, (size_dataset, e),
                                           dtype=jnp.float32)
        # name -> row index bookkeeping: host-side Python glue, not a kernel op.
        self.name_to_index = {}

    def get_sample_index(self, names):
        names = sorted(names)  # matches the original module
        indices = []
        for name in names:
            if name not in self.name_to_index:
                self.name_to_index[name] = len(self.name_to_index)
            indices.append(self.name_to_index[name])
        return jnp.asarray(indices, dtype=jnp.int32)

    def forward(self, batch, num_bones, **kwargs):
        sample_index = self.get_sample_index(batch["name"])
        return articulation_forward(self.embedding, sample_index, num_bones,
                                    **kwargs)


if __name__ == "__main__":
    key = jax.random.PRNGKey(0)
    k_emb, k_img = jax.random.split(key)

    size_dataset = 16
    num_bones = 8
    batch_size = 12  # pads to 16: exercises padding and the 2-step blocked path

    predictor = ArticulationPredictorPallas(size_dataset, num_bones, k_emb)

    batch = {
        "name": [f"sample_{i}" for i in range(batch_size)],
        "image": jax.random.normal(k_img, (batch_size, 3, 16, 16), jnp.float32),
    }

    # Pure-JAX reference (same semantics as the PyTorch module).
    idx = predictor.get_sample_index(batch["name"])
    ref = jnp.tanh(
        predictor.embedding[idx].reshape(batch_size, num_bones, 3)) * RAD

    # Variant A: VMEM-resident table, one-hot MXU gather (chosen by default
    # at this size).
    out_a = jax.block_until_ready(predictor.forward(batch, num_bones))
    assert out_a.shape == (batch_size, num_bones, 3), out_a.shape
    assert out_a.dtype == jnp.float32
    # Row selection is exact; the only deviation source is MXU f32 matmul pass
    # precision (HIGHEST requested), so keep a small safety margin.
    assert jnp.allclose(out_a, ref, atol=5e-4, rtol=0.0), \
        "resident variant mismatch"

    # Variant B: blocked, double-buffered manual-DMA gather (large-table
    # fallback), forced with tb=8 so the 12-row batch runs 2 grid steps and
    # exercises priming + cross-step prefetch.
    out_b = jax.block_until_ready(
        predictor.forward(batch, num_bones, force_blocked=True, block_rows=8))
    assert out_b.shape == (batch_size, num_bones, 3), out_b.shape
    assert jnp.allclose(out_b, ref, atol=1e-6), "blocked variant mismatch"

    print("KERNEL_OK")
</pallas_src>

<mosaic_0001>
module attributes {stable_mosaic.version = 11 : i64} {
  func.func @_resident_onehot_kernel(%arg0: i32, %arg1: memref<16x1xi32, #tpu.memory_space<vmem>>, %arg2: memref<16x24xf32, #tpu.memory_space<vmem>>, %arg3: memref<16x24xf32, #tpu.memory_space<vmem>>) attributes {dimension_semantics = [#tpu.dimension_semantics<parallel>], iteration_bounds = array<i64: 1>, scalar_prefetch = 0 : i64, scratch_operands = 0 : i64, tpu.core_type = #tpu.core_type<tc>, window_params = [{transform_indices = @transform_0, window_bounds = array<i64: 16, 1>}, {pipeline_mode = #tpu.pipeline_mode<synchronous>, transform_indices = @transform_1, window_bounds = array<i64: 16, 24>}, {transform_indices = @transform_2, window_bounds = array<i64: 16, 24>}]} {
    %0 = tpu.iota {dimensions = array<i32: 1>} : vector<16x16xi32>
    %c0 = arith.constant 0 : index
    %c0_0 = arith.constant 0 : index
    %1 = vector.load %arg1[%c0, %c0_0] : memref<16x1xi32, #tpu.memory_space<vmem>>, vector<16x1xi32>
    %2 = vector.broadcast %1 : vector<16x1xi32> to vector<16x16xi32>
    %3 = arith.cmpi eq, %0, %2 : vector<16x16xi32>
    %4 = arith.extui %3 : vector<16x16xi1> to vector<16x16xi32>
    %5 = arith.sitofp %4 : vector<16x16xi32> to vector<16x16xf32>
    %c0_1 = arith.constant 0 : index
    %c0_2 = arith.constant 0 : index
    %6 = vector.load %arg2[%c0_1, %c0_2] : memref<16x24xf32, #tpu.memory_space<vmem>>, vector<16x24xf32>
    %cst = arith.constant dense<0.000000e+00> : vector<16x24xf32>
    %7 = tpu.matmul %5, %6, %cst {dimension_numbers = #tpu.dot_dimension_numbers<[1], [0], [0], [1], [0, 0, 1, 1], [], []>, precision = #tpu.contract_precision<fp32>} : vector<16x16xf32>, vector<16x24xf32>, vector<16x24xf32> -> vector<16x24xf32>
    %8 = math.tanh %7 : vector<16x24xf32>
    %cst_3 = arith.constant 0.17453292 : f32
    %9 = vector.broadcast %cst_3 : f32 to vector<16x24xf32>
    %10 = arith.mulf %8, %9 : vector<16x24xf32>
    %c0_4 = arith.constant 0 : index
    %c0_5 = arith.constant 0 : index
    %11 = vector.load %arg3[%c0_4, %c0_5] : memref<16x24xf32, #tpu.memory_space<vmem>>, vector<16x24xf32>
    tpu.vector_store %arg3[%c0_4, %c0_5], %10 {strides = array<i32>} : memref<16x24xf32, #tpu.memory_space<vmem>>, vector<16x24xf32>,
    return
  }
  func.func @transform_0(%arg0: i32) -> (i32, i32) {
    %c0_i32 = arith.constant 0 : i32
    %c0_i32_0 = arith.constant 0 : i32
    return %arg0, %c0_i32 : i32, i32
  }
  func.func @transform_1(%arg0: i32) -> (i32, i32) {
    %c0_i32 = arith.constant 0 : i32
    %c0_i32_0 = arith.constant 0 : i32
    %c0_i32_1 = arith.constant 0 : i32
    return %c0_i32, %c0_i32_0 : i32, i32
  }
  func.func @transform_2(%arg0: i32) -> (i32, i32) {
    %c0_i32 = arith.constant 0 : i32
    %c0_i32_0 = arith.constant 0 : i32
    return %arg0, %c0_i32 : i32, i32
  }
}

</mosaic_0001>

<llo_original>
// kernel: tpu_custom_call.1
$region0: #{tpu_custom_call.1}
  #allocation0 [shape = 'u32[]', space=smem, size = 0x4, offset = 0x4, fixed_abs, tag = 'smem constant byte address 0x4 - core index']
  #allocation1 [shape = 'u32[144,128]{1,0:T(1,128)}', space=vmem, size = 0x12000, scoped, tag = 'internal scratch']
  %s0 = inlined_call_operand.vmem [shape: s32[16,1], index: 0, kind: input, shape index: {}]
  %s1 = inlined_call_operand.vmem [shape: f32[16,24], index: 1, kind: input, shape index: {}]
  %s2 = inlined_call_operand.hbm [shape: f32[16,24], index: 2, kind: output, shape index: {}]
  %s3 = sld [smem:[#allocation0]]
  $region18: #{tpu_custom_call.1} parent=0
    _
  %s5 = ssub.s32 1, %s3
  %s6 = scalar_select 0, %s5, %s3
  $region1: #{tpu_custom_call.1} parent=0
    #allocation2 [shape = 'u8[8192]{0}', space=vmem, size = 0x2000, scoped, tag = 'output window, operand 0, single buffered']
    #allocation3 [shape = 's32[1]{0}', space=sflag, size = 0x4, scoped, tag = 'scoped memory for tpu_custom_call.1']
    %7 = vsyncpa [#allocation3], 0
    // Predicated region
    $region2: #{tpu_custom_call.1} parent=1 // pred_check
      _
    $region3: #{tpu_custom_call.1} parent=1 // pred_check_branch
      %9 = sbr.rel (0) target = $region5
    $region4: #{tpu_custom_call.1} parent=1 // pred_region
      _
    $region5: #{tpu_custom_call.1} parent=1 // pred_fallthru
      _
    // Predicated region
    $region6: #{tpu_custom_call.1} parent=1 // pred_check
      _
    $region7: #{tpu_custom_call.1} parent=1 // pred_check_branch
      %11 = sbr.rel (0) target = $region9
    $region8: #{tpu_custom_call.1} parent=1 // pred_region
      _
    $region9: #{tpu_custom_call.1} parent=1 // pred_fallthru
      _
    %v12 = vlaneseq
    %v13 = vand.u32 %v12, 127
    %v14 = vld [vmem:[%s0] sm:$0xff]
    %v15 = vld [vmem:[%s0 + $0x8] sm:$0xff]
    %16 = vset.pattern.permute.xlu0 0
    %17 = vperm.xlu0 %16, %v14
    %v18 = vpop.permute.xlu0 %17
    %19 = vset.pattern.permute.xlu0 0
    %20 = vperm.xlu0 %19, %v15
    %v21 = vpop.permute.xlu0 %20
    %vm22 = vcmp.eq.s32.totalorder %v13, %v18
    %vm23 = vcmp.eq.s32.totalorder %v13, %v21
    %v24 = vsel %vm22, 1, 0
    %v25 = vsel %vm23, 1, 0
    %v26 = vcvt.s32.f32 %v24
    %v27 = vcvt.s32.f32 %v25
    %v28 = vld [vmem:[%s1] sm:$0xff]
    %v29 = vld [vmem:[%s1 + $0x8] sm:$0xff]
    %vm30 = vcmask 130048
    %v32 = vsel %vm30, %v26, 0
    %v35 = vsel %vm30, %v27, 0
    %37 = vmatprep.subr.mxu0 0.0
    %v38 = vand.u32 %v28, 4294901760
    %39 = vmatpush1.msra.mxu0 %v38
    %40 = vmatprep.subr.mxu0 0.0
    %v41 = vand.u32 %v29, 4294901760
    %42 = vmatpush1.msra.mxu0 %v41
    %43 = vmatprep.subr.mxu0 0.0
    %44 = vmatpush1.msra.mxu0 0.0
    %45 = vmatprep.subr.mxu0 0.0
    %46 = vmatpush1.msra.mxu0 0.0
    %47 = vmatprep.subr.mxu0 0.0
    %48 = vmatpush1.msra.mxu0 0.0
    %49 = vmatprep.subr.mxu0 0.0
    %50 = vmatpush1.msra.mxu0 0.0
    %51 = vmatprep.subr.mxu0 0.0
    %52 = vmatpush1.msra.mxu0 0.0
    %53 = vmatprep.subr.mxu0 0.0
    %54 = vmatpush1.msra.mxu0 0.0
    %55 = vmatprep.subr.mxu0 0.0
    %56 = vmatpush1.msra.mxu0 0.0
    %57 = vmatprep.subr.mxu0 0.0
    %58 = vmatpush1.msra.mxu0 0.0
    %59 = vmatprep.subr.mxu0 0.0
    %60 = vmatpush1.msra.mxu0 0.0
    %61 = vmatprep.subr.mxu0 0.0
    %62 = vmatpush1.msra.mxu0 0.0
    %63 = vmatprep.subr.mxu0 0.0
    %64 = vmatpush1.msra.mxu0 0.0
    %65 = vmatprep.subr.mxu0 0.0
    %66 = vmatpush1.msra.mxu0 0.0
    %67 = vmatprep.subr.mxu0 0.0
    %68 = vmatpush1.msra.mxu0 0.0
    %69 = vmatprep.subr.mxu0 0.0
    %70 = vmatpush1.msra.mxu0 0.0
    %71 = vmatprep.subr.mxu0 0.0
    %72 = vmatpush1.msra.mxu0 0.0
    %73 = vmatprep.subr.mxu0 0.0
    %74 = vmatpush1.msra.mxu0 0.0
    %75 = vmatprep.subr.mxu0 0.0
    %76 = vmatpush1.msra.mxu0 0.0
    %77 = vmatprep.subr.mxu0 0.0
    %78 = vmatpush1.msra.mxu0 0.0
    %79 = vmatprep.subr.mxu0 0.0
    %80 = vmatpush1.msra.mxu0 0.0
    %81 = vmatprep.subr.mxu0 0.0
    %82 = vmatpush1.msra.mxu0 0.0
    %83 = vmatprep.subr.mxu0 0.0
    %84 = vmatpush1.msra.mxu0 0.0
    %85 = vmatprep.subr.mxu0 0.0
    %86 = vmatpush1.msra.mxu0 0.0
    %87 = vmatprep.subr.mxu0 0.0
    %88 = vmatpush1.msra.mxu0 0.0
    %89 = vmatprep.subr.mxu0 0.0
    %90 = vmatpush1.msra.mxu0 0.0
    %91 = vmatprep.subr.mxu0 0.0
    %92 = vmatpush1.msra.mxu0 0.0
    %93 = vmatprep.subr.mxu0 0.0
    %94 = vmatpush1.msra.mxu0 0.0
    %95 = vmatprep.subr.mxu0 0.0
    %96 = vmatpush1.msra.mxu0 0.0
    %97 = vmatprep.subr.mxu0 0.0
    %98 = vmatpush1.msra.mxu0 0.0
    %99 = vmatprep.subr.mxu0 0.0
    %100 = vmatpush1.msra.mxu0 0.0
    %101 = vmatprep.subr.mxu0 0.0
    %102 = vmatpush1.msra.mxu0 0.0
    %103 = vmatprep.mubr.f32.mxu0 0.0
    %v104 = vand.u32 %v32, 4294901760
    %v105 = vsub.f32 %v32, %v104
    %v106 = vand.u32 %v105, 4294901760
    %v107 = vsub.f32 %v105, %v106
    %v108 = vand.u32 %v107, 4294901760
    %109 = vmatmul.mubr.f32.gmra.mrb[0].mxu0 %v108
    %v110 = vpop.f32.mrb[0].mxu0
    %v111 = vadd.f32 0.0, %v110
    %v112 = vpop.f32.mrb[0].mxu0
    %113 = vmatprep.mubr.f32.mxu0 0.0
    %v114 = vand.u32 %v35, 4294901760
    %v115 = vsub.f32 %v35, %v114
    %v116 = vand.u32 %v115, 4294901760
    %v117 = vsub.f32 %v115, %v116
    %v118 = vand.u32 %v117, 4294901760
    %119 = vmatmul.mubr.f32.gmra.mrb[0].mxu0 %v118
    %v120 = vpop.f32.mrb[0].mxu0
    %v121 = vadd.f32 0.0, %v120
    %v122 = vpop.f32.mrb[0].mxu0
    %123 = vdwg.mxu0
    %124 = vmatprep.subr.mxu0 0.0
    %v125 = vand.u32 %v28, 4294901760
    %v126 = vsub.f32 %v28, %v125
    %v127 = vand.u32 %v126, 4294901760
    %v128 = vsub.f32 %v126, %v127
    %v129 = vand.u32 %v128, 4294901760
    %130 = vmatpush1.msra.mxu0 %v129
    %131 = vmatprep.subr.mxu0 0.0
    %v132 = vand.u32 %v29, 4294901760
    %v133 = vsub.f32 %v29, %v132
    %v134 = vand.u32 %v133, 4294901760
    %v135 = vsub.f32 %v133, %v134
    %v136 = vand.u32 %v135, 4294901760
    %137 = vmatpush1.msra.mxu0 %v136
    %138 = vmatprep.subr.mxu0 0.0
    %139 = vmatpush1.msra.mxu0 0.0
    %140 = vmatprep.subr.mxu0 0.0
    %141 = vmatpush1.msra.mxu0 0.0
    %142 = vmatprep.subr.mxu0 0.0
    %143 = vmatpush1.msra.mxu0 0.0
    %144 = vmatprep.subr.mxu0 0.0
    %145 = vmatpush1.msra.mxu0 0.0
    %146 = vmatprep.subr.mxu0 0.0
    %147 = vmatpush1.msra.mxu0 0.0
    %148 = vmatprep.subr.mxu0 0.0
    %149 = vmatpush1.msra.mxu0 0.0
    %150 = vmatprep.subr.mxu0 0.0
    %151 = vmatpush1.msra.mxu0 0.0
    %152 = vmatprep.subr.mxu0 0.0
    %153 = vmatpush1.msra.mxu0 0.0
    %154 = vmatprep.subr.mxu0 0.0
    %155 = vmatpush1.msra.mxu0 0.0
    %156 = vmatprep.subr.mxu0 0.0
    %157 = vmatpush1.msra.mxu0 0.0
    %158 = vmatprep.subr.mxu0 0.0
    %159 = vmatpush1.msra.mxu0 0.0
    %160 = vmatprep.subr.mxu0 0.0
    %161 = vmatpush1.msra.mxu0 0.0
    %162 = vmatprep.subr.mxu0 0.0
    %163 = vmatpush1.msra.mxu0 0.0
    %164 = vmatprep.subr.mxu0 0.0
    %165 = vmatpush1.msra.mxu0 0.0
    %166 = vmatprep.subr.mxu0 0.0
    %167 = vmatpush1.msra.mxu0 0.0
    %168 = vmatprep.subr.mxu0 0.0
    %169 = vmatpush1.msra.mxu0 0.0
    %170 = vmatprep.subr.mxu0 0.0
    %171 = vmatpush1.msra.mxu0 0.0
    %172 = vmatprep.subr.mxu0 0.0
    %173 = vmatpush1.msra.mxu0 0.0
    %174 = vmatprep.subr.mxu0 0.0
    %175 = vmatpush1.msra.mxu0 0.0
    %176 = vmatprep.subr.mxu0 0.0
    %177 = vmatpush1.msra.mxu0 0.0
    %178 = vmatprep.subr.mxu0 0.0
    %179 = vmatpush1.msra.mxu0 0.0
    %180 = vmatprep.subr.mxu0 0.0
    %181 = vmatpush1.msra.mxu0 0.0
    %182 = vmatprep.subr.mxu0 0.0
    %183 = vmatpush1.msra.mxu0 0.0
    %184 = vmatprep.subr.mxu0 0.0
    %185 = vmatpush1.msra.mxu0 0.0
    %186 = vmatprep.subr.mxu0 0.0
    %187 = vmatpush1.msra.mxu0 0.0
    %188 = vmatprep.subr.mxu0 0.0
    %189 = vmatpush1.msra.mxu0 0.0
    %190 = vmatprep.subr.mxu0 0.0
    %191 = vmatpush1.msra.mxu0 0.0
    %192 = vmatprep.subr.mxu0 0.0
    %193 = vmatpush1.msra.mxu0 0.0
    %194 = vmatprep.subr.mxu0 0.0
    %195 = vmatpush1.msra.mxu0 0.0
    %196 = vmatprep.subr.mxu0 0.0
    %197 = vmatpush1.msra.mxu0 0.0
    %198 = vmatprep.mubr.f32.mxu0 0.0
    %v199 = vand.u32 %v32, 4294901760
    %200 = vmatmul.mubr.f32.gmra.mrb[0].mxu0 %v199
    %v201 = vpop.f32.mrb[0].mxu0
    %v202 = vadd.f32 %v111, %v201
    %v203 = vpop.f32.mrb[0].mxu0
    %204 = vmatprep.mubr.f32.mxu0 0.0
    %v205 = vand.u32 %v35, 4294901760
    %206 = vmatmul.mubr.f32.gmra.mrb[0].mxu0 %v205
    %v207 = vpop.f32.mrb[0].mxu0
    %v208 = vadd.f32 %v121, %v207
    %v209 = vpop.f32.mrb[0].mxu0
    %210 = vdwg.mxu0
    %211 = vmatprep.subr.mxu0 0.0
    %v212 = vand.u32 %v28, 4294901760
    %v213 = vsub.f32 %v28, %v212
    %214 = vmatpush1.msra.mxu0 %v213
    %215 = vmatprep.subr.mxu0 0.0
    %v216 = vand.u32 %v29, 4294901760
    %v217 = vsub.f32 %v29, %v216
    %218 = vmatpush1.msra.mxu0 %v217
    %219 = vmatprep.subr.mxu0 0.0
    %220 = vmatpush1.msra.mxu0 0.0
    %221 = vmatprep.subr.mxu0 0.0
    %222 = vmatpush1.msra.mxu0 0.0
    %223 = vmatprep.subr.mxu0 0.0
    %224 = vmatpush1.msra.mxu0 0.0
    %225 = vmatprep.subr.mxu0 0.0
    %226 = vmatpush1.msra.mxu0 0.0
    %227 = vmatprep.subr.mxu0 0.0
    %228 = vmatpush1.msra.mxu0 0.0
    %229 = vmatprep.subr.mxu0 0.0
    %230 = vmatpush1.msra.mxu0 0.0
    %231 = vmatprep.subr.mxu0 0.0
    %232 = vmatpush1.msra.mxu0 0.0
    %233 = vmatprep.subr.mxu0 0.0
    %234 = vmatpush1.msra.mxu0 0.0
    %235 = vmatprep.subr.mxu0 0.0
    %236 = vmatpush1.msra.mxu0 0.0
    %237 = vmatprep.subr.mxu0 0.0
    %238 = vmatpush1.msra.mxu0 0.0
    %239 = vmatprep.subr.mxu0 0.0
    %240 = vmatpush1.msra.mxu0 0.0
    %241 = vmatprep.subr.mxu0 0.0
    %242 = vmatpush1.msra.mxu0 0.0
    %243 = vmatprep.subr.mxu0 0.0
    %244 = vmatpush1.msra.mxu0 0.0
    %245 = vmatprep.subr.mxu0 0.0
    %246 = vmatpush1.msra.mxu0 0.0
    %247 = vmatprep.subr.mxu0 0.0
    %248 = vmatpush1.msra.mxu0 0.0
    %249 = vmatprep.subr.mxu0 0.0
    %250 = vmatpush1.msra.mxu0 0.0
    %251 = vmatprep.subr.mxu0 0.0
    %252 = vmatpush1.msra.mxu0 0.0
    %253 = vmatprep.subr.mxu0 0.0
    %254 = vmatpush1.msra.mxu0 0.0
    %255 = vmatprep.subr.mxu0 0.0
    %256 = vmatpush1.msra.mxu0 0.0
    %257 = vmatprep.subr.mxu0 0.0
    %258 = vmatpush1.msra.mxu0 0.0
    %259 = vmatprep.subr.mxu0 0.0
    %260 = vmatpush1.msra.mxu0 0.0
    %261 = vmatprep.subr.mxu0 0.0
    %262 = vmatpush1.msra.mxu0 0.0
    %263 = vmatprep.subr.mxu0 0.0
    %264 = vmatpush1.msra.mxu0 0.0
    %265 = vmatprep.subr.mxu0 0.0
    %266 = vmatpush1.msra.mxu0 0.0
    %267 = vmatprep.subr.mxu0 0.0
    %268 = vmatpush1.msra.mxu0 0.0
    %269 = vmatprep.subr.mxu0 0.0
    %270 = vmatpush1.msra.mxu0 0.0
    %271 = vmatprep.subr.mxu0 0.0
    %272 = vmatpush1.msra.mxu0 0.0
    %273 = vmatprep.subr.mxu0 0.0
    %274 = vmatpush1.msra.mxu0 0.0
    %275 = vmatprep.subr.mxu0 0.0
    %276 = vmatpush1.msra.mxu0 0.0
    %277 = vmatprep.subr.mxu0 0.0
    %278 = vmatpush1.msra.mxu0 0.0
    %279 = vmatprep.mubr.f32.mxu0 0.0
    %v280 = vand.u32 %v32, 4294901760
    %v281 = vsub.f32 %v32, %v280
    %282 = vmatmul.mubr.f32.gmra.mrb[0].mxu0 %v281
    %v283 = vpop.f32.mrb[0].mxu0
    %v284 = vadd.f32 %v202, %v283
    %v285 = vpop.f32.mrb[0].mxu0
    %286 = vmatprep.mubr.f32.mxu0 0.0
    %v287 = vand.u32 %v35, 4294901760
    %v288 = vsub.f32 %v35, %v287
    %289 = vmatmul.mubr.f32.gmra.mrb[0].mxu0 %v288
    %v290 = vpop.f32.mrb[0].mxu0
    %v291 = vadd.f32 %v208, %v290
    %v292 = vpop.f32.mrb[0].mxu0
    %293 = vdwg.mxu0
    %294 = vmatprep.subr.mxu0 0.0
    %v295 = vand.u32 %v28, 4294901760
    %296 = vmatpush1.msra.mxu0 %v295
    %297 = vmatprep.subr.mxu0 0.0
    %v298 = vand.u32 %v29, 4294901760
    %299 = vmatpush1.msra.mxu0 %v298
    %300 = vmatprep.subr.mxu0 0.0
    %301 = vmatpush1.msra.mxu0 0.0
    %302 = vmatprep.subr.mxu0 0.0
    %303 = vmatpush1.msra.mxu0 0.0
    %304 = vmatprep.subr.mxu0 0.0
    %305 = vmatpush1.msra.mxu0 0.0
    %306 = vmatprep.subr.mxu0 0.0
    %307 = vmatpush1.msra.mxu0 0.0
    %308 = vmatprep.subr.mxu0 0.0
    %309 = vmatpush1.msra.mxu0 0.0
    %310 = vmatprep.subr.mxu0 0.0
    %311 = vmatpush1.msra.mxu0 0.0
    %312 = vmatprep.subr.mxu0 0.0
    %313 = vmatpush1.msra.mxu0 0.0
    %314 = vmatprep.subr.mxu0 0.0
    %315 = vmatpush1.msra.mxu0 0.0
    %316 = vmatprep.subr.mxu0 0.0
    %317 = vmatpush1.msra.mxu0 0.0
    %318 = vmatprep.subr.mxu0 0.0
    %319 = vmatpush1.msra.mxu0 0.0
    %320 = vmatprep.subr.mxu0 0.0
    %321 = vmatpush1.msra.mxu0 0.0
    %322 = vmatprep.subr.mxu0 0.0
    %323 = vmatpush1.msra.mxu0 0.0
    %324 = vmatprep.subr.mxu0 0.0
    %325 = vmatpush1.msra.mxu0 0.0
    %326 = vmatprep.subr.mxu0 0.0
    %327 = vmatpush1.msra.mxu0 0.0
    %328 = vmatprep.subr.mxu0 0.0
    %329 = vmatpush1.msra.mxu0 0.0
    %330 = vmatprep.subr.mxu0 0.0
    %331 = vmatpush1.msra.mxu0 0.0
    %332 = vmatprep.subr.mxu0 0.0
    %333 = vmatpush1.msra.mxu0 0.0
    %334 = vmatprep.subr.mxu0 0.0
    %335 = vmatpush1.msra.mxu0 0.0
    %336 = vmatprep.subr.mxu0 0.0
    %337 = vmatpush1.msra.mxu0 0.0
    %338 = vmatprep.subr.mxu0 0.0
    %339 = vmatpush1.msra.mxu0 0.0
    %340 = vmatprep.subr.mxu0 0.0
    %341 = vmatpush1.msra.mxu0 0.0
    %342 = vmatprep.subr.mxu0 0.0
    %343 = vmatpush1.msra.mxu0 0.0
    %344 = vmatprep.subr.mxu0 0.0
    %345 = vmatpush1.msra.mxu0 0.0
    %346 = vmatprep.subr.mxu0 0.0
    %347 = vmatpush1.msra.mxu0 0.0
    %348 = vmatprep.subr.mxu0 0.0
    %349 = vmatpush1.msra.mxu0 0.0
    %350 = vmatprep.subr.mxu0 0.0
    %351 = vmatpush1.msra.mxu0 0.0
    %352 = vmatprep.subr.mxu0 0.0
    %353 = vmatpush1.msra.mxu0 0.0
    %354 = vmatprep.subr.mxu0 0.0
    %355 = vmatpush1.msra.mxu0 0.0
    %356 = vmatprep.subr.mxu0 0.0
    %357 = vmatpush1.msra.mxu0 0.0
    %358 = vmatprep.subr.mxu0 0.0
    %359 = vmatpush1.msra.mxu0 0.0
    %360 = vmatprep.mubr.f32.mxu0 0.0
    %v361 = vand.u32 %v32, 4294901760
    %v362 = vsub.f32 %v32, %v361
    %v363 = vand.u32 %v362, 4294901760
    %364 = vmatmul.mubr.f32.gmra.mrb[0].mxu0 %v363
    %v365 = vpop.f32.mrb[0].mxu0
    %v366 = vadd.f32 %v284, %v365
    %v367 = vpop.f32.mrb[0].mxu0
    %368 = vmatprep.mubr.f32.mxu0 0.0
    %v369 = vand.u32 %v35, 4294901760
    %v370 = vsub.f32 %v35, %v369
    %v371 = vand.u32 %v370, 4294901760
    %372 = vmatmul.mubr.f32.gmra.mrb[0].mxu0 %v371
    %v373 = vpop.f32.mrb[0].mxu0
    %v374 = vadd.f32 %v291, %v373
    %v375 = vpop.f32.mrb[0].mxu0
    %376 = vdwg.mxu0
    %377 = vmatprep.subr.mxu0 0.0
    %v378 = vand.u32 %v28, 4294901760
    %v379 = vsub.f32 %v28, %v378
    %v380 = vand.u32 %v379, 4294901760
    %381 = vmatpush1.msra.mxu0 %v380
    %382 = vmatprep.subr.mxu0 0.0
    %v383 = vand.u32 %v29, 4294901760
    %v384 = vsub.f32 %v29, %v383
    %v385 = vand.u32 %v384, 4294901760
    %386 = vmatpush1.msra.mxu0 %v385
    %387 = vmatprep.subr.mxu0 0.0
    %388 = vmatpush1.msra.mxu0 0.0
    %389 = vmatprep.subr.mxu0 0.0
    %390 = vmatpush1.msra.mxu0 0.0
    %391 = vmatprep.subr.mxu0 0.0
    %392 = vmatpush1.msra.mxu0 0.0
    %393 = vmatprep.subr.mxu0 0.0
    %394 = vmatpush1.msra.mxu0 0.0
    %395 = vmatprep.subr.mxu0 0.0
    %396 = vmatpush1.msra.mxu0 0.0
    %397 = vmatprep.subr.mxu0 0.0
    %398 = vmatpush1.msra.mxu0 0.0
    %399 = vmatprep.subr.mxu0 0.0
    %400 = vmatpush1.msra.mxu0 0.0
    %401 = vmatprep.subr.mxu0 0.0
    %402 = vmatpush1.msra.mxu0 0.0
    %403 = vmatprep.subr.mxu0 0.0
    %404 = vmatpush1.msra.mxu0 0.0
    %405 = vmatprep.subr.mxu0 0.0
    %406 = vmatpush1.msra.mxu0 0.0
    %407 = vmatprep.subr.mxu0 0.0
    %408 = vmatpush1.msra.mxu0 0.0
    %409 = vmatprep.subr.mxu0 0.0
    %410 = vmatpush1.msra.mxu0 0.0
    %411 = vmatprep.subr.mxu0 0.0
    %412 = vmatpush1.msra.mxu0 0.0
    %413 = vmatprep.subr.mxu0 0.0
    %414 = vmatpush1.msra.mxu0 0.0
    %415 = vmatprep.subr.mxu0 0.0
    %416 = vmatpush1.msra.mxu0 0.0
    %417 = vmatprep.subr.mxu0 0.0
    %418 = vmatpush1.msra.mxu0 0.0
    %419 = vmatprep.subr.mxu0 0.0
    %420 = vmatpush1.msra.mxu0 0.0
    %421 = vmatprep.subr.mxu0 0.0
    %422 = vmatpush1.msra.mxu0 0.0
    %423 = vmatprep.subr.mxu0 0.0
    %424 = vmatpush1.msra.mxu0 0.0
    %425 = vmatprep.subr.mxu0 0.0
    %426 = vmatpush1.msra.mxu0 0.0
    %427 = vmatprep.subr.mxu0 0.0
    %428 = vmatpush1.msra.mxu0 0.0
    %429 = vmatprep.subr.mxu0 0.0
    %430 = vmatpush1.msra.mxu0 0.0
    %431 = vmatprep.subr.mxu0 0.0
    %432 = vmatpush1.msra.mxu0 0.0
    %433 = vmatprep.subr.mxu0 0.0
    %434 = vmatpush1.msra.mxu0 0.0
    %435 = vmatprep.subr.mxu0 0.0
    %436 = vmatpush1.msra.mxu0 0.0
    %437 = vmatprep.subr.mxu0 0.0
    %438 = vmatpush1.msra.mxu0 0.0
    %439 = vmatprep.subr.mxu0 0.0
    %440 = vmatpush1.msra.mxu0 0.0
    %441 = vmatprep.subr.mxu0 0.0
    %442 = vmatpush1.msra.mxu0 0.0
    %443 = vmatprep.subr.mxu0 0.0
    %444 = vmatpush1.msra.mxu0 0.0
    %445 = vmatprep.subr.mxu0 0.0
    %446 = vmatpush1.msra.mxu0 0.0
    %447 = vmatprep.mubr.f32.mxu0 0.0
    %v448 = vand.u32 %v32, 4294901760
    %449 = vmatmul.mubr.f32.gmra.mrb[0].mxu0 %v448
    %v450 = vpop.f32.mrb[0].mxu0
    %v451 = vadd.f32 %v366, %v450
    %v452 = vpop.f32.mrb[0].mxu0
    %453 = vmatprep.mubr.f32.mxu0 0.0
    %v454 = vand.u32 %v35, 4294901760
    %455 = vmatmul.mubr.f32.gmra.mrb[0].mxu0 %v454
    %v456 = vpop.f32.mrb[0].mxu0
    %v457 = vadd.f32 %v374, %v456
    %v458 = vpop.f32.mrb[0].mxu0
    %459 = vdwg.mxu0
    %460 = vmatprep.subr.mxu0 0.0
    %v461 = vand.u32 %v28, 4294901760
    %462 = vmatpush1.msra.mxu0 %v461
    %463 = vmatprep.subr.mxu0 0.0
    %v464 = vand.u32 %v29, 4294901760
    %465 = vmatpush1.msra.mxu0 %v464
    %466 = vmatprep.subr.mxu0 0.0
    %467 = vmatpush1.msra.mxu0 0.0
    %468 = vmatprep.subr.mxu0 0.0
    %469 = vmatpush1.msra.mxu0 0.0
    %470 = vmatprep.subr.mxu0 0.0
    %471 = vmatpush1.msra.mxu0 0.0
    %472 = vmatprep.subr.mxu0 0.0
    %473 = vmatpush1.msra.mxu0 0.0
    %474 = vmatprep.subr.mxu0 0.0
    %475 = vmatpush1.msra.mxu0 0.0
    %476 = vmatprep.subr.mxu0 0.0
    %477 = vmatpush1.msra.mxu0 0.0
    %478 = vmatprep.subr.mxu0 0.0
    %479 = vmatpush1.msra.mxu0 0.0
    %480 = vmatprep.subr.mxu0 0.0
    %481 = vmatpush1.msra.mxu0 0.0
    %482 = vmatprep.subr.mxu0 0.0
    %483 = vmatpush1.msra.mxu0 0.0
    %484 = vmatprep.subr.mxu0 0.0
    %485 = vmatpush1.msra.mxu0 0.0
    %486 = vmatprep.subr.mxu0 0.0
    %487 = vmatpush1.msra.mxu0 0.0
    %488 = vmatprep.subr.mxu0 0.0
    %489 = vmatpush1.msra.mxu0 0.0
    %490 = vmatprep.subr.mxu0 0.0
    %491 = vmatpush1.msra.mxu0 0.0
    %492 = vmatprep.subr.mxu0 0.0
    %493 = vmatpush1.msra.mxu0 0.0
    %494 = vmatprep.subr.mxu0 0.0
    %495 = vmatpush1.msra.mxu0 0.0
    %496 = vmatprep.subr.mxu0 0.0
    %497 = vmatpush1.msra.mxu0 0.0
    %498 = vmatprep.subr.mxu0 0.0
    %499 = vmatpush1.msra.mxu0 0.0
    %500 = vmatprep.subr.mxu0 0.0
    %501 = vmatpush1.msra.mxu0 0.0
    %502 = vmatprep.subr.mxu0 0.0
    %503 = vmatpush1.msra.mxu0 0.0
    %504 = vmatprep.subr.mxu0 0.0
    %505 = vmatpush1.msra.mxu0 0.0
    %506 = vmatprep.subr.mxu0 0.0
    %507 = vmatpush1.msra.mxu0 0.0
    %508 = vmatprep.subr.mxu0 0.0
    %509 = vmatpush1.msra.mxu0 0.0
    %510 = vmatprep.subr.mxu0 0.0
    %511 = vmatpush1.msra.mxu0 0.0
    %512 = vmatprep.subr.mxu0 0.0
    %513 = vmatpush1.msra.mxu0 0.0
    %514 = vmatprep.subr.mxu0 0.0
    %515 = vmatpush1.msra.mxu0 0.0
    %516 = vmatprep.subr.mxu0 0.0
    %517 = vmatpush1.msra.mxu0 0.0
    %518 = vmatprep.subr.mxu0 0.0
    %519 = vmatpush1.msra.mxu0 0.0
    %520 = vmatprep.subr.mxu0 0.0
    %521 = vmatpush1.msra.mxu0 0.0
    %522 = vmatprep.subr.mxu0 0.0
    %523 = vmatpush1.msra.mxu0 0.0
    %524 = vmatprep.subr.mxu0 0.0
    %525 = vmatpush1.msra.mxu0 0.0
    %526 = vmatprep.mubr.f32.mxu0 0.0
    %v527 = vand.u32 %v32, 4294901760
    %528 = vmatmul.mubr.f32.gmra.mrb[0].mxu0 %v527
    %v529 = vpop.f32.mrb[0].mxu0
    %v530 = vadd.f32 %v451, %v529
    %v531 = vpop.f32.mrb[0].mxu0
    %532 = vmatprep.mubr.f32.mxu0 0.0
    %v533 = vand.u32 %v35, 4294901760
    %534 = vmatmul.mubr.f32.gmra.mrb[0].mxu0 %v533
    %v535 = vpop.f32.mrb[0].mxu0
    %v536 = vadd.f32 %v457, %v535
    %v537 = vpop.f32.mrb[0].mxu0
    %538 = vdwg.mxu0
    %v539 = vtanh.pop %v530
    %v540 = vtanh.pop %v536
    %v541 = vmul.f32 %v539, 0.17453292
    %v542 = vmul.f32 %v540, 0.17453292
    %vm543 = vcmask 195584
    %544 = vst.msk [vmem:[#allocation2] sm:$0xff] %vm543, %v541
    %545 = vst.msk [vmem:[#allocation2 + $0x8] sm:$0xff] %vm543, %v542
    // Predicated region
    $region10: #{tpu_custom_call.1} parent=1 // pred_check
      _
    $region11: #{tpu_custom_call.1} parent=1 // pred_check_branch
      %547 = sbr.rel (0) target = $region13
    $region12: #{tpu_custom_call.1} parent=1 // pred_region
      %s549 = ssub.s32 256, 256
      %550 = vsyncadd [#allocation3], %s549
      %s551 = sshll.u32 [#allocation2], 4
      %s552 = int_to_ptr.vmem [resolvable:$true] %s551
      %557 = dma.vmem_to_hbm [thread:$0]  %s552, 256, %s2, [#allocation3], 128, 128, 8
    $region13: #{tpu_custom_call.1} parent=1 // pred_fallthru
      _
    // Predicated region
    $region14: #{tpu_custom_call.1} parent=1 // pred_check
      _
    $region15: #{tpu_custom_call.1} parent=1 // pred_check_branch
      %559 = sbr.rel (0) target = $region17
    $region16: #{tpu_custom_call.1} parent=1 // pred_region
      %560 = dma.done [#allocation3], 256
    $region17: #{tpu_custom_call.1} parent=1 // pred_fallthru
      _
    %561 = vsyncpa [#allocation3], 1

</llo_original>
